<compile_context>
chip_gen: v6e
topology: v6e:2x2x1
jax: 0.10.0
libtpu: 0.0.40
codegen_flags: <defaults>
</compile_context>

<pallas_src>
import functools

import jax
import jax.numpy as jnp
from jax.experimental import pallas as pl
from jax.experimental.pallas import tpu as pltpu


def _fused_dae_kernel_t(x_t_ref, *refs, sigmoid_flags):
    """Fused transposed forward.

    refs = (w1, b1, w2, b2, ..., wn, bn, o_ref)
      x_t_ref : (in_f, bt)        activations, batch on lanes
      w_i     : (out_f, in_f)     natural nn.Linear layout
      b_i     : (out_f, 1)        broadcast over the batch (lane) axis
      o_ref   : (out_f_last, bt)
    """
    o_ref = refs[-1]
    param_refs = refs[:-1]

    h = x_t_ref[...]  # (in_f, bt)
    for i, apply_sigmoid in enumerate(sigmoid_flags):
        w = param_refs[2 * i][...]        # (out_f, in_f)
        b = param_refs[2 * i + 1][...]    # (out_f, 1)
        h = jnp.dot(w, h, preferred_element_type=jnp.float32) + b
        if apply_sigmoid:
            h = jax.nn.sigmoid(h)
    o_ref[...] = h.astype(o_ref.dtype)


def naive_dae_forward(x, enc_params, dec_params, *, batch_tile=512):
    """Full Naive_DAE forward as a single pallas_call (lane-dense layout).

    enc_params / dec_params: lists of (w, b) with w: (out_f, in_f) and
    b: (out_f, 1) — i.e. natural nn.Linear weight layout.
    """
    n_enc = len(enc_params)
    layer_params = list(enc_params) + list(dec_params)
    # encode: sigmoid after every encoder except the last; decode: always.
    sigmoid_flags = tuple(
        [i != n_enc - 1 for i in range(n_enc)] + [True] * len(dec_params)
    )

    batch, in_f = x.shape
    out_f = layer_params[-1][0].shape[0]

    # Batch tile: full batch if it fits in one tile, otherwise a 128-multiple
    # so the lane (last) dim of every block is dense and unmasked.
    if batch <= batch_tile:
        bt = batch
    else:
        assert batch_tile % 128 == 0, "batch_tile must be a multiple of 128"
        bt = batch_tile
    num_tiles = pl.cdiv(batch, bt)  # partial last block: OOB writes dropped

    # Layout plumbing only: put batch on the 128-lane axis.
    x_t = x.T  # (in_f, batch)

    in_specs = [pl.BlockSpec((in_f, bt), lambda i: (0, i))]
    args = [x_t]
    for w, b in layer_params:
        fo, fi = w.shape
        # index_map returns (0, 0) every grid step -> weight/bias stay in VMEM.
        in_specs.append(pl.BlockSpec((fo, fi), lambda i: (0, 0)))
        in_specs.append(pl.BlockSpec((fo, 1), lambda i: (0, 0)))
        args.append(w)
        args.append(b)

    # Advisory cost hint for XLA's scheduler.
    flops = 2 * batch * sum(int(w.shape[0]) * int(w.shape[1]) for w, _ in layer_params)
    transcendentals = batch * sum(
        int(w.shape[0]) for (w, _), f in zip(layer_params, sigmoid_flags) if f
    )
    bytes_accessed = 4 * (
        batch * (in_f + out_f) + sum(int(w.size) + int(b.size) for w, b in layer_params)
    )

    kernel = functools.partial(_fused_dae_kernel_t, sigmoid_flags=sigmoid_flags)
    out_t = pl.pallas_call(
        kernel,
        out_shape=jax.ShapeDtypeStruct((out_f, batch), jnp.float32),
        grid=(num_tiles,),
        in_specs=in_specs,
        out_specs=pl.BlockSpec((out_f, bt), lambda i: (0, i)),
        compiler_params=pltpu.CompilerParams(
            dimension_semantics=("parallel",),  # v7x: split batch tiles across 2 TCs
        ),
        cost_estimate=pl.CostEstimate(
            flops=flops,
            transcendentals=transcendentals,
            bytes_accessed=bytes_accessed,
        ),
    )(*args)
    return out_t.T  # back to (batch, out_f)


def init_naive_dae_params(key, layers):
    """Init matching nn.Linear defaults (U(-k, k), k = 1/sqrt(in_features)).

    Stored in natural layout: weight (out_f, in_f), bias (out_f, 1) — exactly
    what the transposed (batch-on-lanes) kernel wants, zero transposes needed.
    """
    enc_params = []
    dec_params = []  # built in encoder order, reversed below (like the module)
    prev = layers[0]
    for layer in layers[1:]:
        key, k1, k2, k3, k4 = jax.random.split(key, 5)
        ke = 1.0 / jnp.sqrt(prev)
        enc_w = jax.random.uniform(k1, (layer, prev), jnp.float32, -ke, ke)
        enc_b = jax.random.uniform(k2, (layer,), jnp.float32, -ke, ke)
        kd = 1.0 / jnp.sqrt(layer)
        dec_w = jax.random.uniform(k3, (prev, layer), jnp.float32, -kd, kd)
        dec_b = jax.random.uniform(k4, (prev,), jnp.float32, -kd, kd)
        enc_params.append((enc_w, enc_b.reshape(layer, 1)))
        dec_params.append((dec_w, dec_b.reshape(prev, 1)))
        prev = layer
    dec_params = list(reversed(dec_params))
    return enc_params, dec_params


def naive_dae_reference(x, enc_params, dec_params):
    """Pure-JAX reference (batch-major) for correctness check."""
    n_enc = len(enc_params)
    h = x
    for i, (w, b) in enumerate(enc_params):
        h = h @ w.T + b.reshape(1, -1)
        if i != n_enc - 1:
            h = jax.nn.sigmoid(h)
    for w, b in dec_params:
        h = jax.nn.sigmoid(h @ w.T + b.reshape(1, -1))
    return h


if __name__ == "__main__":
    layers = [32, 16, 8]   # Naive_DAE([32, 16, 8]): encoders 32->16->8, decoders 8->16->32

    key = jax.random.PRNGKey(0)
    key, kp = jax.random.split(key)
    enc_params, dec_params = init_naive_dae_params(kp, layers)

    # Case 1: tiny batch -> single full block, grid=(1,).
    key, kx = jax.random.split(key)
    x_small = jax.random.normal(kx, (8, layers[0]), dtype=jnp.float32)
    out = jax.block_until_ready(naive_dae_forward(x_small, enc_params, dec_params))
    ref = naive_dae_reference(x_small, enc_params, dec_params)
    assert out.shape == (8, layers[0]), out.shape
    assert jnp.allclose(out, ref, atol=1e-5, rtol=1e-5), "mismatch vs reference (small)"

    # Case 2: multi-tile grid with a partial last block (exercises un-padded
    # cdiv grid + dropped OOB writes + >=2 tiles for v7x megacore).
    key, kx2 = jax.random.split(key)
    x_big = jax.random.normal(kx2, (200, layers[0]), dtype=jnp.float32)
    out2 = jax.block_until_ready(
        naive_dae_forward(x_big, enc_params, dec_params, batch_tile=128)
    )
    ref2 = naive_dae_reference(x_big, enc_params, dec_params)
    assert out2.shape == (200, layers[0]), out2.shape
    assert jnp.allclose(out2, ref2, atol=1e-5, rtol=1e-5), "mismatch vs reference (big)"

    print("KERNEL_OK")
</pallas_src>

<mosaic_0001>
module attributes {stable_mosaic.version = 11 : i64} {
  func.func @_fused_dae_kernel_t(%arg0: i32, %arg1: memref<32x8xf32, #tpu.memory_space<vmem>>, %arg2: memref<16x32xf32, #tpu.memory_space<vmem>>, %arg3: memref<16x1xf32, #tpu.memory_space<vmem>>, %arg4: memref<8x16xf32, #tpu.memory_space<vmem>>, %arg5: memref<8x1xf32, #tpu.memory_space<vmem>>, %arg6: memref<16x8xf32, #tpu.memory_space<vmem>>, %arg7: memref<16x1xf32, #tpu.memory_space<vmem>>, %arg8: memref<32x16xf32, #tpu.memory_space<vmem>>, %arg9: memref<32x1xf32, #tpu.memory_space<vmem>>, %arg10: memref<32x8xf32, #tpu.memory_space<vmem>>) attributes {dimension_semantics = [#tpu.dimension_semantics<parallel>], iteration_bounds = array<i64: 1>, scalar_prefetch = 0 : i64, scratch_operands = 0 : i64, tpu.core_type = #tpu.core_type<tc>, window_params = [{transform_indices = @transform_0, window_bounds = array<i64: 32, 8>}, {pipeline_mode = #tpu.pipeline_mode<synchronous>, transform_indices = @transform_1, window_bounds = array<i64: 16, 32>}, {pipeline_mode = #tpu.pipeline_mode<synchronous>, transform_indices = @transform_2, window_bounds = array<i64: 16, 1>}, {pipeline_mode = #tpu.pipeline_mode<synchronous>, transform_indices = @transform_3, window_bounds = array<i64: 8, 16>}, {pipeline_mode = #tpu.pipeline_mode<synchronous>, transform_indices = @transform_4, window_bounds = array<i64: 8, 1>}, {pipeline_mode = #tpu.pipeline_mode<synchronous>, transform_indices = @transform_5, window_bounds = array<i64: 16, 8>}, {pipeline_mode = #tpu.pipeline_mode<synchronous>, transform_indices = @transform_6, window_bounds = array<i64: 16, 1>}, {pipeline_mode = #tpu.pipeline_mode<synchronous>, transform_indices = @transform_7, window_bounds = array<i64: 32, 16>}, {pipeline_mode = #tpu.pipeline_mode<synchronous>, transform_indices = @transform_8, window_bounds = array<i64: 32, 1>}, {transform_indices = @transform_9, window_bounds = array<i64: 32, 8>}]} {
    %c0 = arith.constant 0 : index
    %c0_0 = arith.constant 0 : index
    %0 = vector.load %arg1[%c0, %c0_0] : memref<32x8xf32, #tpu.memory_space<vmem>>, vector<32x8xf32>
    %c0_1 = arith.constant 0 : index
    %c0_2 = arith.constant 0 : index
    %1 = vector.load %arg2[%c0_1, %c0_2] : memref<16x32xf32, #tpu.memory_space<vmem>>, vector<16x32xf32>
    %c0_3 = arith.constant 0 : index
    %c0_4 = arith.constant 0 : index
    %2 = vector.load %arg3[%c0_3, %c0_4] : memref<16x1xf32, #tpu.memory_space<vmem>>, vector<16x1xf32>
    %cst = arith.constant dense<0.000000e+00> : vector<16x8xf32>
    %3 = tpu.matmul %1, %0, %cst {dimension_numbers = #tpu.dot_dimension_numbers<[1], [0], [0], [1], [0, 0, 1, 1], [], []>} : vector<16x32xf32>, vector<32x8xf32>, vector<16x8xf32> -> vector<16x8xf32>
    %4 = vector.broadcast %2 : vector<16x1xf32> to vector<16x8xf32>
    %5 = arith.addf %3, %4 : vector<16x8xf32>
    %6 = arith.negf %5 : vector<16x8xf32>
    %7 = math.exp %6 : vector<16x8xf32>
    %cst_5 = arith.constant 1.000000e+00 : f32
    %8 = vector.broadcast %cst_5 : f32 to vector<16x8xf32>
    %9 = arith.addf %8, %7 : vector<16x8xf32>
    %10 = arith.divf %8, %9 : vector<16x8xf32>
    %c0_6 = arith.constant 0 : index
    %c0_7 = arith.constant 0 : index
    %11 = vector.load %arg4[%c0_6, %c0_7] : memref<8x16xf32, #tpu.memory_space<vmem>>, vector<8x16xf32>
    %c0_8 = arith.constant 0 : index
    %c0_9 = arith.constant 0 : index
    %12 = vector.load %arg5[%c0_8, %c0_9] : memref<8x1xf32, #tpu.memory_space<vmem>>, vector<8x1xf32>
    %cst_10 = arith.constant dense<0.000000e+00> : vector<8x8xf32>
    %13 = tpu.matmul %11, %10, %cst_10 {dimension_numbers = #tpu.dot_dimension_numbers<[1], [0], [0], [1], [0, 0, 1, 1], [], []>} : vector<8x16xf32>, vector<16x8xf32>, vector<8x8xf32> -> vector<8x8xf32>
    %14 = vector.broadcast %12 : vector<8x1xf32> to vector<8x8xf32>
    %15 = arith.addf %13, %14 : vector<8x8xf32>
    %c0_11 = arith.constant 0 : index
    %c0_12 = arith.constant 0 : index
    %16 = vector.load %arg6[%c0_11, %c0_12] : memref<16x8xf32, #tpu.memory_space<vmem>>, vector<16x8xf32>
    %c0_13 = arith.constant 0 : index
    %c0_14 = arith.constant 0 : index
    %17 = vector.load %arg7[%c0_13, %c0_14] : memref<16x1xf32, #tpu.memory_space<vmem>>, vector<16x1xf32>
    %cst_15 = arith.constant dense<0.000000e+00> : vector<16x8xf32>
    %18 = tpu.matmul %16, %15, %cst_15 {dimension_numbers = #tpu.dot_dimension_numbers<[1], [0], [0], [1], [0, 0, 1, 1], [], []>} : vector<16x8xf32>, vector<8x8xf32>, vector<16x8xf32> -> vector<16x8xf32>
    %19 = vector.broadcast %17 : vector<16x1xf32> to vector<16x8xf32>
    %20 = arith.addf %18, %19 : vector<16x8xf32>
    %21 = arith.negf %20 : vector<16x8xf32>
    %22 = math.exp %21 : vector<16x8xf32>
    %cst_16 = arith.constant 1.000000e+00 : f32
    %23 = vector.broadcast %cst_16 : f32 to vector<16x8xf32>
    %24 = arith.addf %23, %22 : vector<16x8xf32>
    %25 = arith.divf %23, %24 : vector<16x8xf32>
    %c0_17 = arith.constant 0 : index
    %c0_18 = arith.constant 0 : index
    %26 = vector.load %arg8[%c0_17, %c0_18] : memref<32x16xf32, #tpu.memory_space<vmem>>, vector<32x16xf32>
    %c0_19 = arith.constant 0 : index
    %c0_20 = arith.constant 0 : index
    %27 = vector.load %arg9[%c0_19, %c0_20] : memref<32x1xf32, #tpu.memory_space<vmem>>, vector<32x1xf32>
    %cst_21 = arith.constant dense<0.000000e+00> : vector<32x8xf32>
    %28 = tpu.matmul %26, %25, %cst_21 {dimension_numbers = #tpu.dot_dimension_numbers<[1], [0], [0], [1], [0, 0, 1, 1], [], []>} : vector<32x16xf32>, vector<16x8xf32>, vector<32x8xf32> -> vector<32x8xf32>
    %29 = vector.broadcast %27 : vector<32x1xf32> to vector<32x8xf32>
    %30 = arith.addf %28, %29 : vector<32x8xf32>
    %31 = arith.negf %30 : vector<32x8xf32>
    %32 = math.exp %31 : vector<32x8xf32>
    %cst_22 = arith.constant 1.000000e+00 : f32
    %33 = vector.broadcast %cst_22 : f32 to vector<32x8xf32>
    %34 = arith.addf %33, %32 : vector<32x8xf32>
    %35 = arith.divf %33, %34 : vector<32x8xf32>
    %c0_23 = arith.constant 0 : index
    %c0_24 = arith.constant 0 : index
    %36 = vector.load %arg10[%c0_23, %c0_24] : memref<32x8xf32, #tpu.memory_space<vmem>>, vector<32x8xf32>
    tpu.vector_store %arg10[%c0_23, %c0_24], %35 {strides = array<i32>} : memref<32x8xf32, #tpu.memory_space<vmem>>, vector<32x8xf32>,
    return
  }
  func.func @transform_0(%arg0: i32) -> (i32, i32) {
    %c0_i32 = arith.constant 0 : i32
    %c0_i32_0 = arith.constant 0 : i32
    return %c0_i32, %arg0 : i32, i32
  }
  func.func @transform_1(%arg0: i32) -> (i32, i32) {
    %c0_i32 = arith.constant 0 : i32
    %c0_i32_0 = arith.constant 0 : i32
    %c0_i32_1 = arith.constant 0 : i32
    return %c0_i32, %c0_i32_0 : i32, i32
  }
  func.func @transform_2(%arg0: i32) -> (i32, i32) {
    %c0_i32 = arith.constant 0 : i32
    %c0_i32_0 = arith.constant 0 : i32
    %c0_i32_1 = arith.constant 0 : i32
    return %c0_i32, %c0_i32_0 : i32, i32
  }
  func.func @transform_3(%arg0: i32) -> (i32, i32) {
    %c0_i32 = arith.constant 0 : i32
    %c0_i32_0 = arith.constant 0 : i32
    %c0_i32_1 = arith.constant 0 : i32
    return %c0_i32, %c0_i32_0 : i32, i32
  }
  func.func @transform_4(%arg0: i32) -> (i32, i32) {
    %c0_i32 = arith.constant 0 : i32
    %c0_i32_0 = arith.constant 0 : i32
    %c0_i32_1 = arith.constant 0 : i32
    return %c0_i32, %c0_i32_0 : i32, i32
  }
  func.func @transform_5(%arg0: i32) -> (i32, i32) {
    %c0_i32 = arith.constant 0 : i32
    %c0_i32_0 = arith.constant 0 : i32
    %c0_i32_1 = arith.constant 0 : i32
    return %c0_i32, %c0_i32_0 : i32, i32
  }
  func.func @transform_6(%arg0: i32) -> (i32, i32) {
    %c0_i32 = arith.constant 0 : i32
    %c0_i32_0 = arith.constant 0 : i32
    %c0_i32_1 = arith.constant 0 : i32
    return %c0_i32, %c0_i32_0 : i32, i32
  }
  func.func @transform_7(%arg0: i32) -> (i32, i32) {
    %c0_i32 = arith.constant 0 : i32
    %c0_i32_0 = arith.constant 0 : i32
    %c0_i32_1 = arith.constant 0 : i32
    return %c0_i32, %c0_i32_0 : i32, i32
  }
  func.func @transform_8(%arg0: i32) -> (i32, i32) {
    %c0_i32 = arith.constant 0 : i32
    %c0_i32_0 = arith.constant 0 : i32
    %c0_i32_1 = arith.constant 0 : i32
    return %c0_i32, %c0_i32_0 : i32, i32
  }
  func.func @transform_9(%arg0: i32) -> (i32, i32) {
    %c0_i32 = arith.constant 0 : i32
    %c0_i32_0 = arith.constant 0 : i32
    return %c0_i32, %arg0 : i32, i32
  }
}

</mosaic_0001>

<llo_original>
// kernel: tpu_custom_call.1
$region0: #{tpu_custom_call.1}
  #allocation0 [shape = 'u32[]', space=smem, size = 0x4, offset = 0x4, fixed_abs, tag = 'smem constant byte address 0x4 - core index']
  #allocation1 [shape = 'u32[144,128]{1,0:T(1,128)}', space=vmem, size = 0x12000, scoped, tag = 'internal scratch']
  %s0 = inlined_call_operand.vmem [shape: f32[32,8], index: 0, kind: input, shape index: {}]
  %s1 = inlined_call_operand.vmem [shape: f32[16,32], index: 1, kind: input, shape index: {}]
  %s2 = inlined_call_operand.vmem [shape: f32[16,1], index: 2, kind: input, shape index: {}]
  %s3 = inlined_call_operand.vmem [shape: f32[8,16], index: 3, kind: input, shape index: {}]
  %s4 = inlined_call_operand.vmem [shape: f32[8,1], index: 4, kind: input, shape index: {}]
  %s5 = inlined_call_operand.vmem [shape: f32[16,8], index: 5, kind: input, shape index: {}]
  %s6 = inlined_call_operand.vmem [shape: f32[16,1], index: 6, kind: input, shape index: {}]
  %s7 = inlined_call_operand.vmem [shape: f32[32,16], index: 7, kind: input, shape index: {}]
  %s8 = inlined_call_operand.vmem [shape: f32[32,1], index: 8, kind: input, shape index: {}]
  %s9 = inlined_call_operand.vmem [shape: f32[32,8], index: 9, kind: output, shape index: {}]
  %s10 = sld [smem:[#allocation0]]
  $region46: #{tpu_custom_call.1} parent=0
    _
  %s12 = ssub.s32 1, %s10
  %s13 = scalar_select 0, %s12, %s10
  // Predicated region
  $region2: #{tpu_custom_call.1} parent=0 // pred_check
    _
  $region3: #{tpu_custom_call.1} parent=0 // pred_check_branch
    %15 = sbr.rel (0) target = $region5
  $region4: #{tpu_custom_call.1} parent=0 // pred_region
    _
  $region5: #{tpu_custom_call.1} parent=0 // pred_fallthru
    _
  // Predicated region
  $region6: #{tpu_custom_call.1} parent=0 // pred_check
    _
  $region7: #{tpu_custom_call.1} parent=0 // pred_check_branch
    %17 = sbr.rel (0) target = $region9
  $region8: #{tpu_custom_call.1} parent=0 // pred_region
    _
  $region9: #{tpu_custom_call.1} parent=0 // pred_fallthru
    _
  // Predicated region
  $region10: #{tpu_custom_call.1} parent=0 // pred_check
    _
  $region11: #{tpu_custom_call.1} parent=0 // pred_check_branch
    %19 = sbr.rel (0) target = $region13
  $region12: #{tpu_custom_call.1} parent=0 // pred_region
    _
  $region13: #{tpu_custom_call.1} parent=0 // pred_fallthru
    _
  // Predicated region
  $region14: #{tpu_custom_call.1} parent=0 // pred_check
    _
  $region15: #{tpu_custom_call.1} parent=0 // pred_check_branch
    %21 = sbr.rel (0) target = $region17
  $region16: #{tpu_custom_call.1} parent=0 // pred_region
    _
  $region17: #{tpu_custom_call.1} parent=0 // pred_fallthru
    _
  // Predicated region
  $region18: #{tpu_custom_call.1} parent=0 // pred_check
    _
  $region19: #{tpu_custom_call.1} parent=0 // pred_check_branch
    %23 = sbr.rel (0) target = $region21
  $region20: #{tpu_custom_call.1} parent=0 // pred_region
    _
  $region21: #{tpu_custom_call.1} parent=0 // pred_fallthru
    _
  // Predicated region
  $region22: #{tpu_custom_call.1} parent=0 // pred_check
    _
  $region23: #{tpu_custom_call.1} parent=0 // pred_check_branch
    %25 = sbr.rel (0) target = $region25
  $region24: #{tpu_custom_call.1} parent=0 // pred_region
    _
  $region25: #{tpu_custom_call.1} parent=0 // pred_fallthru
    _
  // Predicated region
  $region26: #{tpu_custom_call.1} parent=0 // pred_check
    _
  $region27: #{tpu_custom_call.1} parent=0 // pred_check_branch
    %27 = sbr.rel (0) target = $region29
  $region28: #{tpu_custom_call.1} parent=0 // pred_region
    _
  $region29: #{tpu_custom_call.1} parent=0 // pred_fallthru
    _
  // Predicated region
  $region30: #{tpu_custom_call.1} parent=0 // pred_check
    _
  $region31: #{tpu_custom_call.1} parent=0 // pred_check_branch
    %29 = sbr.rel (0) target = $region33
  $region32: #{tpu_custom_call.1} parent=0 // pred_region
    _
  $region33: #{tpu_custom_call.1} parent=0 // pred_fallthru
    _
  // Predicated region
  $region34: #{tpu_custom_call.1} parent=0 // pred_check
    _
  $region35: #{tpu_custom_call.1} parent=0 // pred_check_branch
    %31 = sbr.rel (0) target = $region37
  $region36: #{tpu_custom_call.1} parent=0 // pred_region
    _
  $region37: #{tpu_custom_call.1} parent=0 // pred_fallthru
    _
  %v32 = vld [vmem:[%s0] sm:$0xff]
  %v33 = vld [vmem:[%s0 + $0x8] sm:$0xff]
  %v34 = vld [vmem:[%s0 + $0x10] sm:$0xff]
  %v35 = vld [vmem:[%s0 + $0x18] sm:$0xff]
  %v36 = vld [vmem:[%s1] sm:$0xff]
  %v37 = vld [vmem:[%s1 + $0x8] sm:$0xff]
  %v38 = vld [vmem:[%s2] sm:$0xff]
  %v39 = vld [vmem:[%s2 + $0x8] sm:$0xff]
  %41 = vset.pattern.permute.xlu0 0
  %42 = vperm.xlu0 %41, %v38
  %v43 = vpop.permute.xlu0 %42
  %46 = vset.pattern.permute.xlu0 0
  %47 = vperm.xlu0 %46, %v39
  %v48 = vpop.permute.xlu0 %47
  %vm50 = vcmask 261120
  %v52 = vsel %vm50, %v36, 0
  %v55 = vsel %vm50, %v37, 0
  %57 = vmatprep.subr.mxu0 0.0
  %58 = vmatpush1.msra.mxu0 0.0
  %59 = vmatprep.subr.mxu0 0.0
  %60 = vmatpush1.msra.mxu0 0.0
  %61 = vmatprep.subr.mxu0 0.0
  %62 = vmatpush1.msra.mxu0 0.0
  %63 = vmatprep.subr.mxu0 0.0
  %64 = vmatpush1.msra.mxu0 0.0
  %65 = vmatprep.subr.mxu0 0.0
  %66 = vmatpush1.msra.mxu0 0.0
  %67 = vmatprep.subr.mxu0 0.0
  %68 = vmatpush1.msra.mxu0 0.0
  %69 = vmatprep.subr.mxu0 0.0
  %70 = vmatpush1.msra.mxu0 0.0
  %71 = vmatprep.subr.mxu0 0.0
  %72 = vmatpush1.msra.mxu0 0.0
  %73 = vmatprep.subr.mxu0 0.0
  %74 = vmatpush1.msra.mxu0 0.0
  %75 = vmatprep.subr.mxu0 0.0
  %76 = vmatpush1.msra.mxu0 0.0
  %77 = vmatprep.subr.mxu0 0.0
  %78 = vmatpush1.msra.mxu0 0.0
  %79 = vmatprep.subr.mxu0 0.0
  %80 = vmatpush1.msra.mxu0 0.0
  %81 = vmatprep.subr.mxu0 0.0
  %82 = vmatpush1.msra.mxu0 %v35
  %83 = vmatprep.subr.mxu0 0.0
  %84 = vmatpush1.msra.mxu0 %v34
  %85 = vmatprep.subr.mxu0 0.0
  %86 = vmatpush1.msra.mxu0 %v33
  %87 = vmatprep.subr.mxu0 0.0
  %88 = vmatpush1.msra.mxu0 %v32
  %89 = vmatprep.subr.mxu0 0.0
  %90 = vmatpush2.msra.mxu0 0.0
  %91 = vmatprep.subr.mxu0 0.0
  %92 = vmatpush2.msra.mxu0 0.0
  %93 = vmatprep.subr.mxu0 0.0
  %94 = vmatpush2.msra.mxu0 0.0
  %95 = vmatprep.subr.mxu0 0.0
  %96 = vmatpush2.msra.mxu0 0.0
  %97 = vmatprep.subr.mxu0 0.0
  %98 = vmatpush2.msra.mxu0 0.0
  %99 = vmatprep.subr.mxu0 0.0
  %100 = vmatpush2.msra.mxu0 0.0
  %101 = vmatprep.subr.mxu0 0.0
  %102 = vmatpush2.msra.mxu0 0.0
  %103 = vmatprep.subr.mxu0 0.0
  %104 = vmatpush2.msra.mxu0 0.0
  %105 = vmatprep.subr.mxu0 0.0
  %106 = vmatpush2.msra.mxu0 0.0
  %107 = vmatprep.subr.mxu0 0.0
  %108 = vmatpush2.msra.mxu0 0.0
  %109 = vmatprep.subr.mxu0 0.0
  %110 = vmatpush2.msra.mxu0 0.0
  %111 = vmatprep.subr.mxu0 0.0
  %112 = vmatpush2.msra.mxu0 0.0
  %113 = vmatprep.subr.mxu0 0.0
  %114 = vmatpush2.msra.mxu0 0.0
  %115 = vmatprep.subr.mxu0 0.0
  %116 = vmatpush2.msra.mxu0 0.0
  %117 = vmatprep.subr.mxu0 0.0
  %118 = vmatpush2.msra.mxu0 0.0
  %119 = vmatprep.subr.mxu0 0.0
  %120 = vmatpush2.msra.mxu0 0.0
  %121 = vmatprep.mubr.f32.mxu0 0.0
  %122 = vmatmul.mubr.f32.gmra.mxu0 %v52
  %v123 = vpop.f32.mrf.mxu0
  %v124 = vadd.f32 %v43, %v123
  %v125 = vpop.f32.mrf.mxu0
  %126 = vmatprep.mubr.f32.mxu0 0.0
  %127 = vmatmul.mubr.f32.gmra.mxu0 %v55
  %v128 = vpop.f32.mrf.mxu0
  %v129 = vadd.f32 %v48, %v128
  %v130 = vpop.f32.mrf.mxu0
  %131 = vdwg.mxu0
  %v132 = vxor.u32 %v124, 2147483648
  %v133 = vxor.u32 %v129, 2147483648
  %v134 = vmul.f32 %v132, 1.442695
  %v135 = vpow.pop %v134
  %v136 = vmul.f32 %v133, 1.442695
  %v137 = vpow.pop %v136
  %v138 = vadd.f32 %v135, 1.0
  %v139 = vadd.f32 %v137, 1.0
  %v140 = vrcp.pop %v138
  %v141 = vmul.f32 1.0, %v140
  %v142 = vrcp.pop %v139
  %v143 = vmul.f32 1.0, %v142
  %v144 = vld [vmem:[%s3] sm:$0xff]
  %v145 = vld [vmem:[%s4] sm:$0xff]
  %147 = vset.pattern.permute.xlu0 0
  %148 = vperm.xlu0 %147, %v145
  %v149 = vpop.permute.xlu0 %148
  %vm151 = vcmask 130048
  %v153 = vsel %vm151, %v144, 0
  %155 = vmatprep.subr.mxu0 0.0
  %156 = vmatpush1.msra.mxu0 0.0
  %157 = vmatprep.subr.mxu0 0.0
  %158 = vmatpush1.msra.mxu0 0.0
  %159 = vmatprep.subr.mxu0 0.0
  %160 = vmatpush1.msra.mxu0 0.0
  %161 = vmatprep.subr.mxu0 0.0
  %162 = vmatpush1.msra.mxu0 0.0
  %163 = vmatprep.subr.mxu0 0.0
  %164 = vmatpush1.msra.mxu0 0.0
  %165 = vmatprep.subr.mxu0 0.0
  %166 = vmatpush1.msra.mxu0 0.0
  %167 = vmatprep.subr.mxu0 0.0
  %168 = vmatpush1.msra.mxu0 0.0
  %169 = vmatprep.subr.mxu0 0.0
  %170 = vmatpush1.msra.mxu0 0.0
  %171 = vmatprep.subr.mxu0 0.0
  %172 = vmatpush1.msra.mxu0 0.0
  %173 = vmatprep.subr.mxu0 0.0
  %174 = vmatpush1.msra.mxu0 0.0
  %175 = vmatprep.subr.mxu0 0.0
  %176 = vmatpush1.msra.mxu0 0.0
  %177 = vmatprep.subr.mxu0 0.0
  %178 = vmatpush1.msra.mxu0 0.0
  %179 = vmatprep.subr.mxu0 0.0
  %180 = vmatpush1.msra.mxu0 0.0
  %181 = vmatprep.subr.mxu0 0.0
  %182 = vmatpush1.msra.mxu0 0.0
  %183 = vmatprep.subr.mxu0 0.0
  %184 = vmatpush1.msra.mxu0 %v143
  %185 = vmatprep.subr.mxu0 0.0
  %186 = vmatpush1.msra.mxu0 %v141
  %187 = vmatprep.subr.mxu0 0.0
  %188 = vmatpush2.msra.mxu0 0.0
  %189 = vmatprep.subr.mxu0 0.0
  %190 = vmatpush2.msra.mxu0 0.0
  %191 = vmatprep.subr.mxu0 0.0
  %192 = vmatpush2.msra.mxu0 0.0
  %193 = vmatprep.subr.mxu0 0.0
  %194 = vmatpush2.msra.mxu0 0.0
  %195 = vmatprep.subr.mxu0 0.0
  %196 = vmatpush2.msra.mxu0 0.0
  %197 = vmatprep.subr.mxu0 0.0
  %198 = vmatpush2.msra.mxu0 0.0
  %199 = vmatprep.subr.mxu0 0.0
  %200 = vmatpush2.msra.mxu0 0.0
  %201 = vmatprep.subr.mxu0 0.0
  %202 = vmatpush2.msra.mxu0 0.0
  %203 = vmatprep.subr.mxu0 0.0
  %204 = vmatpush2.msra.mxu0 0.0
  %205 = vmatprep.subr.mxu0 0.0
  %206 = vmatpush2.msra.mxu0 0.0
  %207 = vmatprep.subr.mxu0 0.0
  %208 = vmatpush2.msra.mxu0 0.0
  %209 = vmatprep.subr.mxu0 0.0
  %210 = vmatpush2.msra.mxu0 0.0
  %211 = vmatprep.subr.mxu0 0.0
  %212 = vmatpush2.msra.mxu0 0.0
  %213 = vmatprep.subr.mxu0 0.0
  %214 = vmatpush2.msra.mxu0 0.0
  %215 = vmatprep.subr.mxu0 0.0
  %216 = vmatpush2.msra.mxu0 0.0
  %217 = vmatprep.subr.mxu0 0.0
  %218 = vmatpush2.msra.mxu0 0.0
  %219 = vmatprep.mubr.f32.mxu0 0.0
  %220 = vmatmul.mubr.f32.gmra.mxu0 %v153
  %v221 = vpop.f32.mrf.mxu0
  %v222 = vadd.f32 %v149, %v221
  %v223 = vpop.f32.mrf.mxu0
  %224 = vdwg.mxu0
  %v225 = vld [vmem:[%s5] sm:$0xff]
  %v226 = vld [vmem:[%s5 + $0x8] sm:$0xff]
  %v227 = vld [vmem:[%s6] sm:$0xff]
  %v228 = vld [vmem:[%s6 + $0x8] sm:$0xff]
  %230 = vset.pattern.permute.xlu0 0
  %231 = vperm.xlu0 %230, %v227
  %v232 = vpop.permute.xlu0 %231
  %235 = vset.pattern.permute.xlu0 0
  %236 = vperm.xlu0 %235, %v228
  %v237 = vpop.permute.xlu0 %236
  %vm239 = vcmask 64512
  %v241 = vsel %vm239, %v225, 0
  %v244 = vsel %vm239, %v226, 0
  %246 = vmatprep.subr.mxu0 0.0
  %247 = vmatpush1.msra.mxu0 0.0
  %248 = vmatprep.subr.mxu0 0.0
  %249 = vmatpush1.msra.mxu0 0.0
  %250 = vmatprep.subr.mxu0 0.0
  %251 = vmatpush1.msra.mxu0 0.0
  %252 = vmatprep.subr.mxu0 0.0
  %253 = vmatpush1.msra.mxu0 0.0
  %254 = vmatprep.subr.mxu0 0.0
  %255 = vmatpush1.msra.mxu0 0.0
  %256 = vmatprep.subr.mxu0 0.0
  %257 = vmatpush1.msra.mxu0 0.0
  %258 = vmatprep.subr.mxu0 0.0
  %259 = vmatpush1.msra.mxu0 0.0
  %260 = vmatprep.subr.mxu0 0.0
  %261 = vmatpush1.msra.mxu0 0.0
  %262 = vmatprep.subr.mxu0 0.0
  %263 = vmatpush1.msra.mxu0 0.0
  %264 = vmatprep.subr.mxu0 0.0
  %265 = vmatpush1.msra.mxu0 0.0
  %266 = vmatprep.subr.mxu0 0.0
  %267 = vmatpush1.msra.mxu0 0.0
  %268 = vmatprep.subr.mxu0 0.0
  %269 = vmatpush1.msra.mxu0 0.0
  %270 = vmatprep.subr.mxu0 0.0
  %271 = vmatpush1.msra.mxu0 0.0
  %272 = vmatprep.subr.mxu0 0.0
  %273 = vmatpush1.msra.mxu0 0.0
  %274 = vmatprep.subr.mxu0 0.0
  %275 = vmatpush1.msra.mxu0 0.0
  %276 = vmatprep.subr.mxu0 0.0
  %277 = vmatpush1.msra.mxu0 %v222
  %278 = vmatprep.subr.mxu0 0.0
  %279 = vmatpush2.msra.mxu0 0.0
  %280 = vmatprep.subr.mxu0 0.0
  %281 = vmatpush2.msra.mxu0 0.0
  %282 = vmatprep.subr.mxu0 0.0
  %283 = vmatpush2.msra.mxu0 0.0
  %284 = vmatprep.subr.mxu0 0.0
  %285 = vmatpush2.msra.mxu0 0.0
  %286 = vmatprep.subr.mxu0 0.0
  %287 = vmatpush2.msra.mxu0 0.0
  %288 = vmatprep.subr.mxu0 0.0
  %289 = vmatpush2.msra.mxu0 0.0
  %290 = vmatprep.subr.mxu0 0.0
  %291 = vmatpush2.msra.mxu0 0.0
  %292 = vmatprep.subr.mxu0 0.0
  %293 = vmatpush2.msra.mxu0 0.0
  %294 = vmatprep.subr.mxu0 0.0
  %295 = vmatpush2.msra.mxu0 0.0
  %296 = vmatprep.subr.mxu0 0.0
  %297 = vmatpush2.msra.mxu0 0.0
  %298 = vmatprep.subr.mxu0 0.0
  %299 = vmatpush2.msra.mxu0 0.0
  %300 = vmatprep.subr.mxu0 0.0
  %301 = vmatpush2.msra.mxu0 0.0
  %302 = vmatprep.subr.mxu0 0.0
  %303 = vmatpush2.msra.mxu0 0.0
  %304 = vmatprep.subr.mxu0 0.0
  %305 = vmatpush2.msra.mxu0 0.0
  %306 = vmatprep.subr.mxu0 0.0
  %307 = vmatpush2.msra.mxu0 0.0
  %308 = vmatprep.subr.mxu0 0.0
  %309 = vmatpush2.msra.mxu0 0.0
  %310 = vmatprep.mubr.f32.mxu0 0.0
  %311 = vmatmul.mubr.f32.gmra.mxu0 %v241
  %v312 = vpop.f32.mrf.mxu0
  %v313 = vadd.f32 %v232, %v312
  %v314 = vpop.f32.mrf.mxu0
  %315 = vmatprep.mubr.f32.mxu0 0.0
  %316 = vmatmul.mubr.f32.gmra.mxu0 %v244
  %v317 = vpop.f32.mrf.mxu0
  %v318 = vadd.f32 %v237, %v317
  %v319 = vpop.f32.mrf.mxu0
  %320 = vdwg.mxu0
  %v321 = vxor.u32 %v313, 2147483648
  %v322 = vxor.u32 %v318, 2147483648
  %v323 = vmul.f32 %v321, 1.442695
  %v324 = vpow.pop %v323
  %v325 = vmul.f32 %v322, 1.442695
  %v326 = vpow.pop %v325
  %v327 = vadd.f32 %v324, 1.0
  %v328 = vadd.f32 %v326, 1.0
  %v329 = vrcp.pop %v327
  %v330 = vmul.f32 1.0, %v329
  %v331 = vrcp.pop %v328
  %v332 = vmul.f32 1.0, %v331
  %v333 = vld [vmem:[%s7] sm:$0xff]
  %v334 = vld [vmem:[%s7 + $0x8] sm:$0xff]
  %v335 = vld [vmem:[%s7 + $0x10] sm:$0xff]
  %v336 = vld [vmem:[%s7 + $0x18] sm:$0xff]
  %v337 = vld [vmem:[%s8] sm:$0xff]
  %v338 = vld [vmem:[%s8 + $0x8] sm:$0xff]
  %v339 = vld [vmem:[%s8 + $0x10] sm:$0xff]
  %v340 = vld [vmem:[%s8 + $0x18] sm:$0xff]
  %342 = vset.pattern.permute.xlu0 0
  %343 = vperm.xlu0 %342, %v337
  %v344 = vpop.permute.xlu0 %343
  %347 = vset.pattern.permute.xlu0 0
  %348 = vperm.xlu0 %347, %v338
  %v349 = vpop.permute.xlu0 %348
  %352 = vset.pattern.permute.xlu0 0
  %353 = vperm.xlu0 %352, %v339
  %v354 = vpop.permute.xlu0 %353
  %357 = vset.pattern.permute.xlu0 0
  %358 = vperm.xlu0 %357, %v340
  %v359 = vpop.permute.xlu0 %358
  %v362 = vsel %vm151, %v333, 0
  %v365 = vsel %vm151, %v334, 0
  %v368 = vsel %vm151, %v335, 0
  %v371 = vsel %vm151, %v336, 0
  %373 = vmatprep.subr.mxu0 0.0
  %374 = vmatpush1.msra.mxu0 0.0
  %375 = vmatprep.subr.mxu0 0.0
  %376 = vmatpush1.msra.mxu0 0.0
  %377 = vmatprep.subr.mxu0 0.0
  %378 = vmatpush1.msra.mxu0 0.0
  %379 = vmatprep.subr.mxu0 0.0
  %380 = vmatpush1.msra.mxu0 0.0
  %381 = vmatprep.subr.mxu0 0.0
  %382 = vmatpush1.msra.mxu0 0.0
  %383 = vmatprep.subr.mxu0 0.0
  %384 = vmatpush1.msra.mxu0 0.0
  %385 = vmatprep.subr.mxu0 0.0
  %386 = vmatpush1.msra.mxu0 0.0
  %387 = vmatprep.subr.mxu0 0.0
  %388 = vmatpush1.msra.mxu0 0.0
  %389 = vmatprep.subr.mxu0 0.0
  %390 = vmatpush1.msra.mxu0 0.0
  %391 = vmatprep.subr.mxu0 0.0
  %392 = vmatpush1.msra.mxu0 0.0
  %393 = vmatprep.subr.mxu0 0.0
  %394 = vmatpush1.msra.mxu0 0.0
  %395 = vmatprep.subr.mxu0 0.0
  %396 = vmatpush1.msra.mxu0 0.0
  %397 = vmatprep.subr.mxu0 0.0
  %398 = vmatpush1.msra.mxu0 0.0
  %399 = vmatprep.subr.mxu0 0.0
  %400 = vmatpush1.msra.mxu0 0.0
  %401 = vmatprep.subr.mxu0 0.0
  %402 = vmatpush1.msra.mxu0 %v332
  %403 = vmatprep.subr.mxu0 0.0
  %404 = vmatpush1.msra.mxu0 %v330
  %405 = vmatprep.subr.mxu0 0.0
  %406 = vmatpush2.msra.mxu0 0.0
  %407 = vmatprep.subr.mxu0 0.0
  %408 = vmatpush2.msra.mxu0 0.0
  %409 = vmatprep.subr.mxu0 0.0
  %410 = vmatpush2.msra.mxu0 0.0
  %411 = vmatprep.subr.mxu0 0.0
  %412 = vmatpush2.msra.mxu0 0.0
  %413 = vmatprep.subr.mxu0 0.0
  %414 = vmatpush2.msra.mxu0 0.0
  %415 = vmatprep.subr.mxu0 0.0
  %416 = vmatpush2.msra.mxu0 0.0
  %417 = vmatprep.subr.mxu0 0.0
  %418 = vmatpush2.msra.mxu0 0.0
  %419 = vmatprep.subr.mxu0 0.0
  %420 = vmatpush2.msra.mxu0 0.0
  %421 = vmatprep.subr.mxu0 0.0
  %422 = vmatpush2.msra.mxu0 0.0
  %423 = vmatprep.subr.mxu0 0.0
  %424 = vmatpush2.msra.mxu0 0.0
  %425 = vmatprep.subr.mxu0 0.0
  %426 = vmatpush2.msra.mxu0 0.0
  %427 = vmatprep.subr.mxu0 0.0
  %428 = vmatpush2.msra.mxu0 0.0
  %429 = vmatprep.subr.mxu0 0.0
  %430 = vmatpush2.msra.mxu0 0.0
  %431 = vmatprep.subr.mxu0 0.0
  %432 = vmatpush2.msra.mxu0 0.0
  %433 = vmatprep.subr.mxu0 0.0
  %434 = vmatpush2.msra.mxu0 0.0
  %435 = vmatprep.subr.mxu0 0.0
  %436 = vmatpush2.msra.mxu0 0.0
  %437 = vmatprep.mubr.f32.mxu0 0.0
  %438 = vmatmul.mubr.f32.gmra.mxu0 %v362
  %v439 = vpop.f32.mrf.mxu0
  %v440 = vadd.f32 %v344, %v439
  %v441 = vpop.f32.mrf.mxu0
  %442 = vmatprep.mubr.f32.mxu0 0.0
  %443 = vmatmul.mubr.f32.gmra.mxu0 %v365
  %v444 = vpop.f32.mrf.mxu0
  %v445 = vadd.f32 %v349, %v444
  %v446 = vpop.f32.mrf.mxu0
  %447 = vmatprep.mubr.f32.mxu0 0.0
  %448 = vmatmul.mubr.f32.gmra.mxu0 %v368
  %v449 = vpop.f32.mrf.mxu0
  %v450 = vadd.f32 %v354, %v449
  %v451 = vpop.f32.mrf.mxu0
  %452 = vmatprep.mubr.f32.mxu0 0.0
  %453 = vmatmul.mubr.f32.gmra.mxu0 %v371
  %v454 = vpop.f32.mrf.mxu0
  %v455 = vadd.f32 %v359, %v454
  %v456 = vpop.f32.mrf.mxu0
  %457 = vdwg.mxu0
  %v458 = vxor.u32 %v440, 2147483648
  %v459 = vxor.u32 %v445, 2147483648
  %v460 = vxor.u32 %v450, 2147483648
  %v461 = vxor.u32 %v455, 2147483648
  %v462 = vmul.f32 %v458, 1.442695
  %v463 = vpow.pop %v462
  %v464 = vmul.f32 %v459, 1.442695
  %v465 = vpow.pop %v464
  %v466 = vmul.f32 %v460, 1.442695
  %v467 = vpow.pop %v466
  %v468 = vmul.f32 %v461, 1.442695
  %v469 = vpow.pop %v468
  %v470 = vadd.f32 %v463, 1.0
  %v471 = vadd.f32 %v465, 1.0
  %v472 = vadd.f32 %v467, 1.0
  %v473 = vadd.f32 %v469, 1.0
  %v474 = vrcp.pop %v470
  %v475 = vmul.f32 1.0, %v474
  %v476 = vrcp.pop %v471
  %v477 = vmul.f32 1.0, %v476
  %v478 = vrcp.pop %v472
  %v479 = vmul.f32 1.0, %v478
  %v480 = vrcp.pop %v473
  %v481 = vmul.f32 1.0, %v480
  %482 = vst.msk [vmem:[%s9] sm:$0xff] %vm239, %v475
  %483 = vst.msk [vmem:[%s9 + $0x8] sm:$0xff] %vm239, %v477
  %484 = vst.msk [vmem:[%s9 + $0x10] sm:$0xff] %vm239, %v479
  %485 = vst.msk [vmem:[%s9 + $0x18] sm:$0xff] %vm239, %v481
  // Predicated region
  $region38: #{tpu_custom_call.1} parent=0 // pred_check
    _
  $region39: #{tpu_custom_call.1} parent=0 // pred_check_branch
    %487 = sbr.rel (0) target = $region41
  $region40: #{tpu_custom_call.1} parent=0 // pred_region
    _
  $region41: #{tpu_custom_call.1} parent=0 // pred_fallthru
    _
  // Predicated region
  $region42: #{tpu_custom_call.1} parent=0 // pred_check
    _
  $region43: #{tpu_custom_call.1} parent=0 // pred_check_branch
    %489 = sbr.rel (0) target = $region45
  $region44: #{tpu_custom_call.1} parent=0 // pred_region
    _
  $region45: #{tpu_custom_call.1} parent=0 // pred_fallthru
    _

</llo_original>
